<compile_context>
chip_gen: v7x
topology: tpu7x:2x2x1
jax: 0.10.0
libtpu: 0.0.40
codegen_flags: <defaults>
</compile_context>

<pallas_src>
import jax
import jax.numpy as jnp
from jax.experimental import pallas as pl
from jax.experimental.pallas import tpu as pltpu

_LANE = 128


def _mlp_kernel(x_ref, w1_ref, b1_ref, w2_ref, b2_ref, w3_ref, b3_ref, o_ref):
    # x_ref: (1, TN)  -- batch on lanes
    x = x_ref[...]

    # fc1 + ReLU: K=1 contraction done on the VPU as an outer product.
    # (32,1) * (1,TN) -> (32,TN), + (32,1) bias broadcast.
    h = jnp.maximum(w1_ref[...] * x + b1_ref[...], 0.0)

    # fc2 + ReLU, applied 4 times with the same weights (matches torch forward).
    w2 = w2_ref[...]                                   # (32, 32) torch (out, in)
    b2 = jnp.broadcast_to(b2_ref[...], h.shape)        # hoist broadcast out of loop
    for _ in range(4):
        h = jnp.dot(w2, h, preferred_element_type=jnp.float32) + b2
        h = jnp.maximum(h, 0.0)

    # fc3 (no activation): (1,32) @ (32,TN) -> (1,TN); 1-wide axis is the sublane
    # axis, output stays lane-dense.
    y = jnp.dot(w3_ref[...], h, preferred_element_type=jnp.float32) + b3_ref[...]
    o_ref[...] = y.astype(o_ref.dtype)


def net_forward(x, params, tile_n=512):
    """x: (N, 1) float32. params hold torch-layout (out, in) weights and (out, 1) biases."""
    n = x.shape[0]
    w1, b1, w2, b2, w3, b3 = (params[k] for k in ("w1", "b1", "w2", "b2", "w3", "b3"))

    # Tile size: multiple of 128 lanes, capped so (32, TN) activations stay vreg-friendly.
    tn = min(tile_n, max(_LANE, pl.cdiv(n, _LANE) * _LANE))
    n_pad = pl.cdiv(n, tn) * tn

    # Transpose to (features, batch) and zero-pad batch to the tile boundary.
    x_t = jnp.pad(x.astype(jnp.float32).T, ((0, 0), (0, n_pad - n)))

    const = lambda shape: pl.BlockSpec(shape, lambda i: (0,) * len(shape))

    out_t = pl.pallas_call(
        _mlp_kernel,
        out_shape=jax.ShapeDtypeStruct((1, n_pad), jnp.float32),
        grid_spec=pltpu.PrefetchScalarGridSpec(
            num_scalar_prefetch=0,
            grid=(n_pad // tn,),
            in_specs=[
                pl.BlockSpec((1, tn), lambda i: (0, i)),   # x tile (batch on lanes)
                const(w1.shape), const(b1.shape),
                const(w2.shape), const(b2.shape),
                const(w3.shape), const(b3.shape),
            ],
            out_specs=pl.BlockSpec((1, tn), lambda i: (0, i)),
        ),
        compiler_params=pltpu.CompilerParams(
            dimension_semantics=("parallel",),
        ),
    )(x_t, w1, b1, w2, b2, w3, b3)

    return out_t[:, :n].T                               # back to (N, 1)


def init_params(key):
    """Deterministic init matching torch.nn.Linear shapes.

    Weights are stored in torch layout (out, in); biases as (out, 1) column
    vectors so the kernel's transposed (features, batch) layout broadcasts them
    directly.  Uniform(-1/sqrt(fan_in), 1/sqrt(fan_in)) like torch's default.
    """
    ks = jax.random.split(key, 6)

    def lin(kw, kb, fan_in, fan_out):
        bound = 1.0 / jnp.sqrt(float(fan_in))
        w = jax.random.uniform(kw, (fan_out, fan_in), jnp.float32, -bound, bound)
        b = jax.random.uniform(kb, (fan_out, 1), jnp.float32, -bound, bound)
        return w, b

    w1, b1 = lin(ks[0], ks[1], 1, 32)
    w2, b2 = lin(ks[2], ks[3], 32, 32)
    w3, b3 = lin(ks[4], ks[5], 32, 1)
    return dict(w1=w1, b1=b1, w2=w2, b2=b2, w3=w3, b3=b3)


def net_forward_ref(x, p):
    """Pure-JAX reference (standard (N, features) layout) for correctness check."""
    h = jnp.maximum(x @ p["w1"].T + p["b1"].T, 0.0)
    for _ in range(4):
        h = jnp.maximum(h @ p["w2"].T + p["b2"].T, 0.0)
    return h @ p["w3"].T + p["b3"].T


if __name__ == "__main__":
    key = jax.random.PRNGKey(0)
    kx, kp = jax.random.split(key)

    batch = 8
    x = jax.random.normal(kx, (batch, 1), dtype=jnp.float32)
    params = init_params(kp)

    out = net_forward(x, params)
    out = jax.block_until_ready(out)

    ref = net_forward_ref(x, params)
    assert out.shape == (batch, 1)
    assert jnp.allclose(out, ref, atol=1e-5, rtol=1e-5)

    # Also check a batch that is not a multiple of the tile and spans >1 grid step.
    batch2 = 700
    x2 = jax.random.normal(jax.random.PRNGKey(3), (batch2, 1), dtype=jnp.float32)
    out2 = jax.block_until_ready(net_forward(x2, params, tile_n=256))
    ref2 = net_forward_ref(x2, params)
    assert out2.shape == (batch2, 1)
    assert jnp.allclose(out2, ref2, atol=1e-5, rtol=1e-5)

    print("KERNEL_OK")
</pallas_src>

<mosaic_0001>
module attributes {stable_mosaic.version = 11 : i64} {
  func.func @_mlp_kernel(%arg0: i32, %arg1: memref<1x128xf32, #tpu.memory_space<vmem>>, %arg2: memref<32x1xf32, #tpu.memory_space<vmem>>, %arg3: memref<32x1xf32, #tpu.memory_space<vmem>>, %arg4: memref<32x32xf32, #tpu.memory_space<vmem>>, %arg5: memref<32x1xf32, #tpu.memory_space<vmem>>, %arg6: memref<1x32xf32, #tpu.memory_space<vmem>>, %arg7: memref<1x1xf32, #tpu.memory_space<vmem>>, %arg8: memref<1x128xf32, #tpu.memory_space<vmem>>) attributes {dimension_semantics = [#tpu.dimension_semantics<parallel>], iteration_bounds = array<i64: 1>, scalar_prefetch = 0 : i64, scratch_operands = 0 : i64, tpu.core_type = #tpu.core_type<tc>, window_params = [{transform_indices = @transform_0, window_bounds = array<i64: 1, 128>}, {pipeline_mode = #tpu.pipeline_mode<synchronous>, transform_indices = @transform_1, window_bounds = array<i64: 32, 1>}, {pipeline_mode = #tpu.pipeline_mode<synchronous>, transform_indices = @transform_2, window_bounds = array<i64: 32, 1>}, {pipeline_mode = #tpu.pipeline_mode<synchronous>, transform_indices = @transform_3, window_bounds = array<i64: 32, 32>}, {pipeline_mode = #tpu.pipeline_mode<synchronous>, transform_indices = @transform_4, window_bounds = array<i64: 32, 1>}, {pipeline_mode = #tpu.pipeline_mode<synchronous>, transform_indices = @transform_5, window_bounds = array<i64: 1, 32>}, {pipeline_mode = #tpu.pipeline_mode<synchronous>, transform_indices = @transform_6, window_bounds = array<i64: 1, 1>}, {transform_indices = @transform_7, window_bounds = array<i64: 1, 128>}]} {
    %c0 = arith.constant 0 : index
    %c0_0 = arith.constant 0 : index
    %0 = vector.load %arg1[%c0, %c0_0] : memref<1x128xf32, #tpu.memory_space<vmem>>, vector<1x128xf32>
    %c0_1 = arith.constant 0 : index
    %c0_2 = arith.constant 0 : index
    %1 = vector.load %arg2[%c0_1, %c0_2] : memref<32x1xf32, #tpu.memory_space<vmem>>, vector<32x1xf32>
    %2 = vector.broadcast %1 : vector<32x1xf32> to vector<32x128xf32>
    %3 = vector.broadcast %0 : vector<1x128xf32> to vector<32x128xf32>
    %4 = arith.mulf %2, %3 : vector<32x128xf32>
    %c0_3 = arith.constant 0 : index
    %c0_4 = arith.constant 0 : index
    %5 = vector.load %arg3[%c0_3, %c0_4] : memref<32x1xf32, #tpu.memory_space<vmem>>, vector<32x1xf32>
    %6 = vector.broadcast %5 : vector<32x1xf32> to vector<32x128xf32>
    %7 = arith.addf %4, %6 : vector<32x128xf32>
    %cst = arith.constant 0.000000e+00 : f32
    %8 = vector.broadcast %cst : f32 to vector<32x128xf32>
    %9 = arith.maximumf %7, %8 : vector<32x128xf32>
    %c0_5 = arith.constant 0 : index
    %c0_6 = arith.constant 0 : index
    %10 = vector.load %arg4[%c0_5, %c0_6] : memref<32x32xf32, #tpu.memory_space<vmem>>, vector<32x32xf32>
    %c0_7 = arith.constant 0 : index
    %c0_8 = arith.constant 0 : index
    %11 = vector.load %arg5[%c0_7, %c0_8] : memref<32x1xf32, #tpu.memory_space<vmem>>, vector<32x1xf32>
    %12 = vector.shape_cast %11 : vector<32x1xf32> to vector<32x1xf32>
    %13 = vector.broadcast %12 : vector<32x1xf32> to vector<32x128xf32>
    %cst_9 = arith.constant dense<0.000000e+00> : vector<32x128xf32>
    %14 = tpu.matmul %10, %9, %cst_9 {dimension_numbers = #tpu.dot_dimension_numbers<[1], [0], [0], [1], [0, 0, 1, 1], [], []>} : vector<32x32xf32>, vector<32x128xf32>, vector<32x128xf32> -> vector<32x128xf32>
    %15 = arith.addf %14, %13 : vector<32x128xf32>
    %cst_10 = arith.constant 0.000000e+00 : f32
    %16 = vector.broadcast %cst_10 : f32 to vector<32x128xf32>
    %17 = arith.maximumf %15, %16 : vector<32x128xf32>
    %cst_11 = arith.constant dense<0.000000e+00> : vector<32x128xf32>
    %18 = tpu.matmul %10, %17, %cst_11 {dimension_numbers = #tpu.dot_dimension_numbers<[1], [0], [0], [1], [0, 0, 1, 1], [], []>} : vector<32x32xf32>, vector<32x128xf32>, vector<32x128xf32> -> vector<32x128xf32>
    %19 = arith.addf %18, %13 : vector<32x128xf32>
    %cst_12 = arith.constant 0.000000e+00 : f32
    %20 = vector.broadcast %cst_12 : f32 to vector<32x128xf32>
    %21 = arith.maximumf %19, %20 : vector<32x128xf32>
    %cst_13 = arith.constant dense<0.000000e+00> : vector<32x128xf32>
    %22 = tpu.matmul %10, %21, %cst_13 {dimension_numbers = #tpu.dot_dimension_numbers<[1], [0], [0], [1], [0, 0, 1, 1], [], []>} : vector<32x32xf32>, vector<32x128xf32>, vector<32x128xf32> -> vector<32x128xf32>
    %23 = arith.addf %22, %13 : vector<32x128xf32>
    %cst_14 = arith.constant 0.000000e+00 : f32
    %24 = vector.broadcast %cst_14 : f32 to vector<32x128xf32>
    %25 = arith.maximumf %23, %24 : vector<32x128xf32>
    %cst_15 = arith.constant dense<0.000000e+00> : vector<32x128xf32>
    %26 = tpu.matmul %10, %25, %cst_15 {dimension_numbers = #tpu.dot_dimension_numbers<[1], [0], [0], [1], [0, 0, 1, 1], [], []>} : vector<32x32xf32>, vector<32x128xf32>, vector<32x128xf32> -> vector<32x128xf32>
    %27 = arith.addf %26, %13 : vector<32x128xf32>
    %cst_16 = arith.constant 0.000000e+00 : f32
    %28 = vector.broadcast %cst_16 : f32 to vector<32x128xf32>
    %29 = arith.maximumf %27, %28 : vector<32x128xf32>
    %c0_17 = arith.constant 0 : index
    %c0_18 = arith.constant 0 : index
    %30 = vector.load %arg6[%c0_17, %c0_18] : memref<1x32xf32, #tpu.memory_space<vmem>>, vector<1x32xf32>
    %cst_19 = arith.constant dense<0.000000e+00> : vector<1x128xf32>
    %31 = tpu.matmul %30, %29, %cst_19 {dimension_numbers = #tpu.dot_dimension_numbers<[1], [0], [0], [1], [0, 0, 1, 1], [], []>} : vector<1x32xf32>, vector<32x128xf32>, vector<1x128xf32> -> vector<1x128xf32>
    %c0_20 = arith.constant 0 : index
    %c0_21 = arith.constant 0 : index
    %32 = vector.load %arg7[%c0_20, %c0_21] : memref<1x1xf32, #tpu.memory_space<vmem>>, vector<1x1xf32>
    %33 = vector.broadcast %32 : vector<1x1xf32> to vector<1x128xf32>
    %34 = arith.addf %31, %33 : vector<1x128xf32>
    %c0_22 = arith.constant 0 : index
    %c0_23 = arith.constant 0 : index
    %35 = vector.load %arg8[%c0_22, %c0_23] : memref<1x128xf32, #tpu.memory_space<vmem>>, vector<1x128xf32>
    tpu.vector_store %arg8[%c0_22, %c0_23], %34 {strides = array<i32>} : memref<1x128xf32, #tpu.memory_space<vmem>>, vector<1x128xf32>,
    return
  }
  func.func @transform_0(%arg0: i32) -> (i32, i32) {
    %c0_i32 = arith.constant 0 : i32
    %c0_i32_0 = arith.constant 0 : i32
    return %c0_i32, %arg0 : i32, i32
  }
  func.func @transform_1(%arg0: i32) -> (i32, i32) {
    %c0_i32 = arith.constant 0 : i32
    %c0_i32_0 = arith.constant 0 : i32
    %c0_i32_1 = arith.constant 0 : i32
    return %c0_i32, %c0_i32_0 : i32, i32
  }
  func.func @transform_2(%arg0: i32) -> (i32, i32) {
    %c0_i32 = arith.constant 0 : i32
    %c0_i32_0 = arith.constant 0 : i32
    %c0_i32_1 = arith.constant 0 : i32
    return %c0_i32, %c0_i32_0 : i32, i32
  }
  func.func @transform_3(%arg0: i32) -> (i32, i32) {
    %c0_i32 = arith.constant 0 : i32
    %c0_i32_0 = arith.constant 0 : i32
    %c0_i32_1 = arith.constant 0 : i32
    return %c0_i32, %c0_i32_0 : i32, i32
  }
  func.func @transform_4(%arg0: i32) -> (i32, i32) {
    %c0_i32 = arith.constant 0 : i32
    %c0_i32_0 = arith.constant 0 : i32
    %c0_i32_1 = arith.constant 0 : i32
    return %c0_i32, %c0_i32_0 : i32, i32
  }
  func.func @transform_5(%arg0: i32) -> (i32, i32) {
    %c0_i32 = arith.constant 0 : i32
    %c0_i32_0 = arith.constant 0 : i32
    %c0_i32_1 = arith.constant 0 : i32
    return %c0_i32, %c0_i32_0 : i32, i32
  }
  func.func @transform_6(%arg0: i32) -> (i32, i32) {
    %c0_i32 = arith.constant 0 : i32
    %c0_i32_0 = arith.constant 0 : i32
    %c0_i32_1 = arith.constant 0 : i32
    return %c0_i32, %c0_i32_0 : i32, i32
  }
  func.func @transform_7(%arg0: i32) -> (i32, i32) {
    %c0_i32 = arith.constant 0 : i32
    %c0_i32_0 = arith.constant 0 : i32
    return %c0_i32, %arg0 : i32, i32
  }
}

</mosaic_0001>

<llo_original>
// kernel: tpu_custom_call.1
$region0: #{tpu_custom_call.1}
  #allocation0 [shape = 'u32[]', space=smem, size = 0x4, offset = 0x4, fixed_abs, tag = 'smem constant byte address 0x4 - core index']
  #allocation1 [shape = 'u32[144,128]{1,0:T(1,128)}', space=vmem, size = 0x12000, scoped, tag = 'internal scratch']
  #allocation2 [shape = 'f32[1,1]{1,0:T(1,128)S(1)}', space=vmem, size = 0x200, scoped, tag = 'scoped memory for tpu_custom_call.1']
  %s0 = inlined_call_operand.vmem [shape: f32[1,128], index: 0, kind: input, shape index: {}]
  %s1 = inlined_call_operand.vmem [shape: f32[32,1], index: 1, kind: input, shape index: {}]
  %s2 = inlined_call_operand.vmem [shape: f32[32,1], index: 2, kind: input, shape index: {}]
  %s3 = inlined_call_operand.vmem [shape: f32[32,32], index: 3, kind: input, shape index: {}]
  %s4 = inlined_call_operand.vmem [shape: f32[32,1], index: 4, kind: input, shape index: {}]
  %s5 = inlined_call_operand.vmem [shape: f32[1,32], index: 5, kind: input, shape index: {}]
  %s6 = inlined_call_operand.<no memory space> [shape: f32[1,1], index: 6, kind: input, shape index: {}]
  %s7 = inlined_call_operand.hbm [shape: f32[1,128], index: 7, kind: output, shape index: {}]
  %s8 = sld [smem:[#allocation0]]
  $region38: #{tpu_custom_call.1} parent=0
    _
  %s10 = ssub.s32 1, %s8
  %s11 = scalar_select 0, %s10, %s8
  %v12 = vstv %s6
  %13 = vst [vmem:[#allocation2] sm:$0x1] %v12
  $region1: #{tpu_custom_call.1} parent=0
    #allocation3 [shape = 'u8[512]{0}', space=vmem, size = 0x400, scoped, tag = 'output window, operand 0, single buffered']
    #allocation4 [shape = 's32[1]{0}', space=sflag, size = 0x4, scoped, tag = 'scoped memory for tpu_custom_call.1']
    %14 = vsyncpa [#allocation4], 0
    // Predicated region
    $region2: #{tpu_custom_call.1} parent=1 // pred_check
      _
    $region3: #{tpu_custom_call.1} parent=1 // pred_check_branch
      %16 = sbr.rel (0) target = $region5
    $region4: #{tpu_custom_call.1} parent=1 // pred_region
      _
    $region5: #{tpu_custom_call.1} parent=1 // pred_fallthru
      _
    // Predicated region
    $region6: #{tpu_custom_call.1} parent=1 // pred_check
      _
    $region7: #{tpu_custom_call.1} parent=1 // pred_check_branch
      %18 = sbr.rel (0) target = $region9
    $region8: #{tpu_custom_call.1} parent=1 // pred_region
      _
    $region9: #{tpu_custom_call.1} parent=1 // pred_fallthru
      _
    // Predicated region
    $region10: #{tpu_custom_call.1} parent=1 // pred_check
      _
    $region11: #{tpu_custom_call.1} parent=1 // pred_check_branch
      %20 = sbr.rel (0) target = $region13
    $region12: #{tpu_custom_call.1} parent=1 // pred_region
      _
    $region13: #{tpu_custom_call.1} parent=1 // pred_fallthru
      _
    // Predicated region
    $region14: #{tpu_custom_call.1} parent=1 // pred_check
      _
    $region15: #{tpu_custom_call.1} parent=1 // pred_check_branch
      %22 = sbr.rel (0) target = $region17
    $region16: #{tpu_custom_call.1} parent=1 // pred_region
      _
    $region17: #{tpu_custom_call.1} parent=1 // pred_fallthru
      _
    // Predicated region
    $region18: #{tpu_custom_call.1} parent=1 // pred_check
      _
    $region19: #{tpu_custom_call.1} parent=1 // pred_check_branch
      %24 = sbr.rel (0) target = $region21
    $region20: #{tpu_custom_call.1} parent=1 // pred_region
      _
    $region21: #{tpu_custom_call.1} parent=1 // pred_fallthru
      _
    // Predicated region
    $region22: #{tpu_custom_call.1} parent=1 // pred_check
      _
    $region23: #{tpu_custom_call.1} parent=1 // pred_check_branch
      %26 = sbr.rel (0) target = $region25
    $region24: #{tpu_custom_call.1} parent=1 // pred_region
      _
    $region25: #{tpu_custom_call.1} parent=1 // pred_fallthru
      _
    // Predicated region
    $region26: #{tpu_custom_call.1} parent=1 // pred_check
      _
    $region27: #{tpu_custom_call.1} parent=1 // pred_check_branch
      %28 = sbr.rel (0) target = $region29
    $region28: #{tpu_custom_call.1} parent=1 // pred_region
      _
    $region29: #{tpu_custom_call.1} parent=1 // pred_fallthru
      _
    %v29 = vld [vmem:[%s0] sm:$0x1]
    %v30 = vld [vmem:[%s1] sm:$0xff]
    %v31 = vld [vmem:[%s1 + $0x8] sm:$0xff]
    %v32 = vld [vmem:[%s1 + $0x10] sm:$0xff]
    %v33 = vld [vmem:[%s1 + $0x18] sm:$0xff]
    %35 = vset.pattern.permute.xlu0 0
    %36 = vperm.xlu0 %35, %v30
    %v37 = vpop.permute.xlu0 %36
    %40 = vset.pattern.permute.xlu0 0
    %41 = vperm.xlu0 %40, %v31
    %v42 = vpop.permute.xlu0 %41
    %45 = vset.pattern.permute.xlu0 0
    %46 = vperm.xlu0 %45, %v32
    %v47 = vpop.permute.xlu0 %46
    %50 = vset.pattern.permute.xlu0 0
    %51 = vperm.xlu0 %50, %v33
    %v52 = vpop.permute.xlu0 %51
    %v55 = vlaneseq
    %v56 = vshrl.u32 %v55, 7
    %v57 = vsub.s32 0, %v56
    %v58 = vrot.slane %v29, %v57
    %v60 = vmul.f32 %v37, %v58
    %v61 = vmul.f32 %v42, %v58
    %v62 = vmul.f32 %v47, %v58
    %v63 = vmul.f32 %v52, %v58
    %v64 = vld [vmem:[%s2] sm:$0xff]
    %v65 = vld [vmem:[%s2 + $0x8] sm:$0xff]
    %v66 = vld [vmem:[%s2 + $0x10] sm:$0xff]
    %v67 = vld [vmem:[%s2 + $0x18] sm:$0xff]
    %69 = vset.pattern.permute.xlu0 0
    %70 = vperm.xlu0 %69, %v64
    %v71 = vpop.permute.xlu0 %70
    %74 = vset.pattern.permute.xlu0 0
    %75 = vperm.xlu0 %74, %v65
    %v76 = vpop.permute.xlu0 %75
    %79 = vset.pattern.permute.xlu0 0
    %80 = vperm.xlu0 %79, %v66
    %v81 = vpop.permute.xlu0 %80
    %84 = vset.pattern.permute.xlu0 0
    %85 = vperm.xlu0 %84, %v67
    %v86 = vpop.permute.xlu0 %85
    %v88 = vadd.f32 %v60, %v71
    %v89 = vadd.f32 %v61, %v76
    %v90 = vadd.f32 %v62, %v81
    %v91 = vadd.f32 %v63, %v86
    %v92 = vmax.f32 %v88, 0.0
    %v93 = vmax.f32 %v89, 0.0
    %v94 = vmax.f32 %v90, 0.0
    %v95 = vmax.f32 %v91, 0.0
    %v96 = vld [vmem:[%s3] sm:$0xff]
    %v97 = vld [vmem:[%s3 + $0x8] sm:$0xff]
    %v98 = vld [vmem:[%s3 + $0x10] sm:$0xff]
    %v99 = vld [vmem:[%s3 + $0x18] sm:$0xff]
    %v100 = vld [vmem:[%s4] sm:$0xff]
    %v101 = vld [vmem:[%s4 + $0x8] sm:$0xff]
    %v102 = vld [vmem:[%s4 + $0x10] sm:$0xff]
    %v103 = vld [vmem:[%s4 + $0x18] sm:$0xff]
    %105 = vset.pattern.permute.xlu0 0
    %106 = vperm.xlu0 %105, %v100
    %v107 = vpop.permute.xlu0 %106
    %110 = vset.pattern.permute.xlu0 0
    %111 = vperm.xlu0 %110, %v101
    %v112 = vpop.permute.xlu0 %111
    %115 = vset.pattern.permute.xlu0 0
    %116 = vperm.xlu0 %115, %v102
    %v117 = vpop.permute.xlu0 %116
    %120 = vset.pattern.permute.xlu0 0
    %121 = vperm.xlu0 %120, %v103
    %v122 = vpop.permute.xlu0 %121
    %vm124 = vcmask 261120
    %v126 = vsel %vm124, %v96, 0
    %v129 = vsel %vm124, %v97, 0
    %v132 = vsel %vm124, %v98, 0
    %v135 = vsel %vm124, %v99, 0
    %137 = vmatprep.subr.mxu0 0.0
    %138 = vmatpush1.msra.mxu0 %v92
    %139 = vmatprep.subr.mxu0 0.0
    %140 = vmatpush1.msra.mxu0 %v93
    %141 = vmatprep.subr.mxu0 0.0
    %142 = vmatpush1.msra.mxu0 %v94
    %143 = vmatprep.subr.mxu0 0.0
    %144 = vmatpush1.msra.mxu0 %v95
    %145 = vmatprep.subr.mxu0 0.0
    %146 = vmatpush1.msra.mxu0 0.0
    %147 = vmatprep.subr.mxu0 0.0
    %148 = vmatpush1.msra.mxu0 0.0
    %149 = vmatprep.subr.mxu0 0.0
    %150 = vmatpush1.msra.mxu0 0.0
    %151 = vmatprep.subr.mxu0 0.0
    %152 = vmatpush1.msra.mxu0 0.0
    %153 = vmatprep.subr.mxu0 0.0
    %154 = vmatpush1.msra.mxu0 0.0
    %155 = vmatprep.subr.mxu0 0.0
    %156 = vmatpush1.msra.mxu0 0.0
    %157 = vmatprep.subr.mxu0 0.0
    %158 = vmatpush1.msra.mxu0 0.0
    %159 = vmatprep.subr.mxu0 0.0
    %160 = vmatpush1.msra.mxu0 0.0
    %161 = vmatprep.subr.mxu0 0.0
    %162 = vmatpush1.msra.mxu0 0.0
    %163 = vmatprep.subr.mxu0 0.0
    %164 = vmatpush1.msra.mxu0 0.0
    %165 = vmatprep.subr.mxu0 0.0
    %166 = vmatpush1.msra.mxu0 0.0
    %167 = vmatprep.subr.mxu0 0.0
    %168 = vmatpush1.msra.mxu0 0.0
    %169 = vmatprep.subr.mxu0 0.0
    %170 = vmatpush1.msra.mxu0 0.0
    %171 = vmatprep.subr.mxu0 0.0
    %172 = vmatpush1.msra.mxu0 0.0
    %173 = vmatprep.subr.mxu0 0.0
    %174 = vmatpush1.msra.mxu0 0.0
    %175 = vmatprep.subr.mxu0 0.0
    %176 = vmatpush1.msra.mxu0 0.0
    %177 = vmatprep.subr.mxu0 0.0
    %178 = vmatpush1.msra.mxu0 0.0
    %179 = vmatprep.subr.mxu0 0.0
    %180 = vmatpush1.msra.mxu0 0.0
    %181 = vmatprep.subr.mxu0 0.0
    %182 = vmatpush1.msra.mxu0 0.0
    %183 = vmatprep.subr.mxu0 0.0
    %184 = vmatpush1.msra.mxu0 0.0
    %185 = vmatprep.subr.mxu0 0.0
    %186 = vmatpush1.msra.mxu0 0.0
    %187 = vmatprep.subr.mxu0 0.0
    %188 = vmatpush1.msra.mxu0 0.0
    %189 = vmatprep.subr.mxu0 0.0
    %190 = vmatpush1.msra.mxu0 0.0
    %191 = vmatprep.subr.mxu0 0.0
    %192 = vmatpush1.msra.mxu0 0.0
    %193 = vmatprep.subr.mxu0 0.0
    %194 = vmatpush1.msra.mxu0 0.0
    %195 = vmatprep.subr.mxu0 0.0
    %196 = vmatpush1.msra.mxu0 0.0
    %197 = vmatprep.subr.mxu0 0.0
    %198 = vmatpush1.msra.mxu0 0.0
    %199 = vmatprep.subr.mxu0 0.0
    %200 = vmatpush1.msra.mxu0 0.0
    %201 = vmatprep.mubr.f32.mxu0 0.0
    %202 = vmatmul.mubr.f32.gmra.mrb[0].mxu0 %v126
    %v203 = vpop.f32.mrb[0].mxu0
    %v204 = vadd.f32 %v107, %v203
    %v205 = vpop.f32.mrb[0].mxu0
    %206 = vmatprep.mubr.f32.mxu0 0.0
    %207 = vmatmul.mubr.f32.gmra.mrb[0].mxu0 %v129
    %v208 = vpop.f32.mrb[0].mxu0
    %v209 = vadd.f32 %v112, %v208
    %v210 = vpop.f32.mrb[0].mxu0
    %211 = vmatprep.mubr.f32.mxu0 0.0
    %212 = vmatmul.mubr.f32.gmra.mrb[0].mxu0 %v132
    %v213 = vpop.f32.mrb[0].mxu0
    %v214 = vadd.f32 %v117, %v213
    %v215 = vpop.f32.mrb[0].mxu0
    %216 = vmatprep.mubr.f32.mxu0 0.0
    %217 = vmatmul.mubr.f32.gmra.mrb[0].mxu0 %v135
    %v218 = vpop.f32.mrb[0].mxu0
    %v219 = vadd.f32 %v122, %v218
    %v220 = vpop.f32.mrb[0].mxu0
    %221 = vdwg.mxu0
    %v222 = vmax.f32 %v204, 0.0
    %v223 = vmax.f32 %v209, 0.0
    %v224 = vmax.f32 %v214, 0.0
    %v225 = vmax.f32 %v219, 0.0
    %226 = vmatprep.subr.mxu0 0.0
    %227 = vmatpush1.msra.mxu0 %v222
    %228 = vmatprep.subr.mxu0 0.0
    %229 = vmatpush1.msra.mxu0 %v223
    %230 = vmatprep.subr.mxu0 0.0
    %231 = vmatpush1.msra.mxu0 %v224
    %232 = vmatprep.subr.mxu0 0.0
    %233 = vmatpush1.msra.mxu0 %v225
    %234 = vmatprep.subr.mxu0 0.0
    %235 = vmatpush1.msra.mxu0 0.0
    %236 = vmatprep.subr.mxu0 0.0
    %237 = vmatpush1.msra.mxu0 0.0
    %238 = vmatprep.subr.mxu0 0.0
    %239 = vmatpush1.msra.mxu0 0.0
    %240 = vmatprep.subr.mxu0 0.0
    %241 = vmatpush1.msra.mxu0 0.0
    %242 = vmatprep.subr.mxu0 0.0
    %243 = vmatpush1.msra.mxu0 0.0
    %244 = vmatprep.subr.mxu0 0.0
    %245 = vmatpush1.msra.mxu0 0.0
    %246 = vmatprep.subr.mxu0 0.0
    %247 = vmatpush1.msra.mxu0 0.0
    %248 = vmatprep.subr.mxu0 0.0
    %249 = vmatpush1.msra.mxu0 0.0
    %250 = vmatprep.subr.mxu0 0.0
    %251 = vmatpush1.msra.mxu0 0.0
    %252 = vmatprep.subr.mxu0 0.0
    %253 = vmatpush1.msra.mxu0 0.0
    %254 = vmatprep.subr.mxu0 0.0
    %255 = vmatpush1.msra.mxu0 0.0
    %256 = vmatprep.subr.mxu0 0.0
    %257 = vmatpush1.msra.mxu0 0.0
    %258 = vmatprep.subr.mxu0 0.0
    %259 = vmatpush1.msra.mxu0 0.0
    %260 = vmatprep.subr.mxu0 0.0
    %261 = vmatpush1.msra.mxu0 0.0
    %262 = vmatprep.subr.mxu0 0.0
    %263 = vmatpush1.msra.mxu0 0.0
    %264 = vmatprep.subr.mxu0 0.0
    %265 = vmatpush1.msra.mxu0 0.0
    %266 = vmatprep.subr.mxu0 0.0
    %267 = vmatpush1.msra.mxu0 0.0
    %268 = vmatprep.subr.mxu0 0.0
    %269 = vmatpush1.msra.mxu0 0.0
    %270 = vmatprep.subr.mxu0 0.0
    %271 = vmatpush1.msra.mxu0 0.0
    %272 = vmatprep.subr.mxu0 0.0
    %273 = vmatpush1.msra.mxu0 0.0
    %274 = vmatprep.subr.mxu0 0.0
    %275 = vmatpush1.msra.mxu0 0.0
    %276 = vmatprep.subr.mxu0 0.0
    %277 = vmatpush1.msra.mxu0 0.0
    %278 = vmatprep.subr.mxu0 0.0
    %279 = vmatpush1.msra.mxu0 0.0
    %280 = vmatprep.subr.mxu0 0.0
    %281 = vmatpush1.msra.mxu0 0.0
    %282 = vmatprep.subr.mxu0 0.0
    %283 = vmatpush1.msra.mxu0 0.0
    %284 = vmatprep.subr.mxu0 0.0
    %285 = vmatpush1.msra.mxu0 0.0
    %286 = vmatprep.subr.mxu0 0.0
    %287 = vmatpush1.msra.mxu0 0.0
    %288 = vmatprep.subr.mxu0 0.0
    %289 = vmatpush1.msra.mxu0 0.0
    %290 = vmatprep.mubr.f32.mxu0 0.0
    %291 = vmatmul.mubr.f32.gmra.mrb[0].mxu0 %v126
    %v292 = vpop.f32.mrb[0].mxu0
    %v293 = vadd.f32 %v107, %v292
    %v294 = vpop.f32.mrb[0].mxu0
    %295 = vmatprep.mubr.f32.mxu0 0.0
    %296 = vmatmul.mubr.f32.gmra.mrb[0].mxu0 %v129
    %v297 = vpop.f32.mrb[0].mxu0
    %v298 = vadd.f32 %v112, %v297
    %v299 = vpop.f32.mrb[0].mxu0
    %300 = vmatprep.mubr.f32.mxu0 0.0
    %301 = vmatmul.mubr.f32.gmra.mrb[0].mxu0 %v132
    %v302 = vpop.f32.mrb[0].mxu0
    %v303 = vadd.f32 %v117, %v302
    %v304 = vpop.f32.mrb[0].mxu0
    %305 = vmatprep.mubr.f32.mxu0 0.0
    %306 = vmatmul.mubr.f32.gmra.mrb[0].mxu0 %v135
    %v307 = vpop.f32.mrb[0].mxu0
    %v308 = vadd.f32 %v122, %v307
    %v309 = vpop.f32.mrb[0].mxu0
    %310 = vdwg.mxu0
    %v311 = vmax.f32 %v293, 0.0
    %v312 = vmax.f32 %v298, 0.0
    %v313 = vmax.f32 %v303, 0.0
    %v314 = vmax.f32 %v308, 0.0
    %315 = vmatprep.subr.mxu0 0.0
    %316 = vmatpush1.msra.mxu0 %v311
    %317 = vmatprep.subr.mxu0 0.0
    %318 = vmatpush1.msra.mxu0 %v312
    %319 = vmatprep.subr.mxu0 0.0
    %320 = vmatpush1.msra.mxu0 %v313
    %321 = vmatprep.subr.mxu0 0.0
    %322 = vmatpush1.msra.mxu0 %v314
    %323 = vmatprep.subr.mxu0 0.0
    %324 = vmatpush1.msra.mxu0 0.0
    %325 = vmatprep.subr.mxu0 0.0
    %326 = vmatpush1.msra.mxu0 0.0
    %327 = vmatprep.subr.mxu0 0.0
    %328 = vmatpush1.msra.mxu0 0.0
    %329 = vmatprep.subr.mxu0 0.0
    %330 = vmatpush1.msra.mxu0 0.0
    %331 = vmatprep.subr.mxu0 0.0
    %332 = vmatpush1.msra.mxu0 0.0
    %333 = vmatprep.subr.mxu0 0.0
    %334 = vmatpush1.msra.mxu0 0.0
    %335 = vmatprep.subr.mxu0 0.0
    %336 = vmatpush1.msra.mxu0 0.0
    %337 = vmatprep.subr.mxu0 0.0
    %338 = vmatpush1.msra.mxu0 0.0
    %339 = vmatprep.subr.mxu0 0.0
    %340 = vmatpush1.msra.mxu0 0.0
    %341 = vmatprep.subr.mxu0 0.0
    %342 = vmatpush1.msra.mxu0 0.0
    %343 = vmatprep.subr.mxu0 0.0
    %344 = vmatpush1.msra.mxu0 0.0
    %345 = vmatprep.subr.mxu0 0.0
    %346 = vmatpush1.msra.mxu0 0.0
    %347 = vmatprep.subr.mxu0 0.0
    %348 = vmatpush1.msra.mxu0 0.0
    %349 = vmatprep.subr.mxu0 0.0
    %350 = vmatpush1.msra.mxu0 0.0
    %351 = vmatprep.subr.mxu0 0.0
    %352 = vmatpush1.msra.mxu0 0.0
    %353 = vmatprep.subr.mxu0 0.0
    %354 = vmatpush1.msra.mxu0 0.0
    %355 = vmatprep.subr.mxu0 0.0
    %356 = vmatpush1.msra.mxu0 0.0
    %357 = vmatprep.subr.mxu0 0.0
    %358 = vmatpush1.msra.mxu0 0.0
    %359 = vmatprep.subr.mxu0 0.0
    %360 = vmatpush1.msra.mxu0 0.0
    %361 = vmatprep.subr.mxu0 0.0
    %362 = vmatpush1.msra.mxu0 0.0
    %363 = vmatprep.subr.mxu0 0.0
    %364 = vmatpush1.msra.mxu0 0.0
    %365 = vmatprep.subr.mxu0 0.0
    %366 = vmatpush1.msra.mxu0 0.0
    %367 = vmatprep.subr.mxu0 0.0
    %368 = vmatpush1.msra.mxu0 0.0
    %369 = vmatprep.subr.mxu0 0.0
    %370 = vmatpush1.msra.mxu0 0.0
    %371 = vmatprep.subr.mxu0 0.0
    %372 = vmatpush1.msra.mxu0 0.0
    %373 = vmatprep.subr.mxu0 0.0
    %374 = vmatpush1.msra.mxu0 0.0
    %375 = vmatprep.subr.mxu0 0.0
    %376 = vmatpush1.msra.mxu0 0.0
    %377 = vmatprep.subr.mxu0 0.0
    %378 = vmatpush1.msra.mxu0 0.0
    %379 = vmatprep.mubr.f32.mxu0 0.0
    %380 = vmatmul.mubr.f32.gmra.mrb[0].mxu0 %v126
    %v381 = vpop.f32.mrb[0].mxu0
    %v382 = vadd.f32 %v107, %v381
    %v383 = vpop.f32.mrb[0].mxu0
    %384 = vmatprep.mubr.f32.mxu0 0.0
    %385 = vmatmul.mubr.f32.gmra.mrb[0].mxu0 %v129
    %v386 = vpop.f32.mrb[0].mxu0
    %v387 = vadd.f32 %v112, %v386
    %v388 = vpop.f32.mrb[0].mxu0
    %389 = vmatprep.mubr.f32.mxu0 0.0
    %390 = vmatmul.mubr.f32.gmra.mrb[0].mxu0 %v132
    %v391 = vpop.f32.mrb[0].mxu0
    %v392 = vadd.f32 %v117, %v391
    %v393 = vpop.f32.mrb[0].mxu0
    %394 = vmatprep.mubr.f32.mxu0 0.0
    %395 = vmatmul.mubr.f32.gmra.mrb[0].mxu0 %v135
    %v396 = vpop.f32.mrb[0].mxu0
    %v397 = vadd.f32 %v122, %v396
    %v398 = vpop.f32.mrb[0].mxu0
    %399 = vdwg.mxu0
    %v400 = vmax.f32 %v382, 0.0
    %v401 = vmax.f32 %v387, 0.0
    %v402 = vmax.f32 %v392, 0.0
    %v403 = vmax.f32 %v397, 0.0
    %404 = vmatprep.subr.mxu0 0.0
    %405 = vmatpush1.msra.mxu0 %v400
    %406 = vmatprep.subr.mxu0 0.0
    %407 = vmatpush1.msra.mxu0 %v401
    %408 = vmatprep.subr.mxu0 0.0
    %409 = vmatpush1.msra.mxu0 %v402
    %410 = vmatprep.subr.mxu0 0.0
    %411 = vmatpush1.msra.mxu0 %v403
    %412 = vmatprep.subr.mxu0 0.0
    %413 = vmatpush1.msra.mxu0 0.0
    %414 = vmatprep.subr.mxu0 0.0
    %415 = vmatpush1.msra.mxu0 0.0
    %416 = vmatprep.subr.mxu0 0.0
    %417 = vmatpush1.msra.mxu0 0.0
    %418 = vmatprep.subr.mxu0 0.0
    %419 = vmatpush1.msra.mxu0 0.0
    %420 = vmatprep.subr.mxu0 0.0
    %421 = vmatpush1.msra.mxu0 0.0
    %422 = vmatprep.subr.mxu0 0.0
    %423 = vmatpush1.msra.mxu0 0.0
    %424 = vmatprep.subr.mxu0 0.0
    %425 = vmatpush1.msra.mxu0 0.0
    %426 = vmatprep.subr.mxu0 0.0
    %427 = vmatpush1.msra.mxu0 0.0
    %428 = vmatprep.subr.mxu0 0.0
    %429 = vmatpush1.msra.mxu0 0.0
    %430 = vmatprep.subr.mxu0 0.0
    %431 = vmatpush1.msra.mxu0 0.0
    %432 = vmatprep.subr.mxu0 0.0
    %433 = vmatpush1.msra.mxu0 0.0
    %434 = vmatprep.subr.mxu0 0.0
    %435 = vmatpush1.msra.mxu0 0.0
    %436 = vmatprep.subr.mxu0 0.0
    %437 = vmatpush1.msra.mxu0 0.0
    %438 = vmatprep.subr.mxu0 0.0
    %439 = vmatpush1.msra.mxu0 0.0
    %440 = vmatprep.subr.mxu0 0.0
    %441 = vmatpush1.msra.mxu0 0.0
    %442 = vmatprep.subr.mxu0 0.0
    %443 = vmatpush1.msra.mxu0 0.0
    %444 = vmatprep.subr.mxu0 0.0
    %445 = vmatpush1.msra.mxu0 0.0
    %446 = vmatprep.subr.mxu0 0.0
    %447 = vmatpush1.msra.mxu0 0.0
    %448 = vmatprep.subr.mxu0 0.0
    %449 = vmatpush1.msra.mxu0 0.0
    %450 = vmatprep.subr.mxu0 0.0
    %451 = vmatpush1.msra.mxu0 0.0
    %452 = vmatprep.subr.mxu0 0.0
    %453 = vmatpush1.msra.mxu0 0.0
    %454 = vmatprep.subr.mxu0 0.0
    %455 = vmatpush1.msra.mxu0 0.0
    %456 = vmatprep.subr.mxu0 0.0
    %457 = vmatpush1.msra.mxu0 0.0
    %458 = vmatprep.subr.mxu0 0.0
    %459 = vmatpush1.msra.mxu0 0.0
    %460 = vmatprep.subr.mxu0 0.0
    %461 = vmatpush1.msra.mxu0 0.0
    %462 = vmatprep.subr.mxu0 0.0
    %463 = vmatpush1.msra.mxu0 0.0
    %464 = vmatprep.subr.mxu0 0.0
    %465 = vmatpush1.msra.mxu0 0.0
    %466 = vmatprep.subr.mxu0 0.0
    %467 = vmatpush1.msra.mxu0 0.0
    %468 = vmatprep.mubr.f32.mxu0 0.0
    %469 = vmatmul.mubr.f32.gmra.mrb[0].mxu0 %v126
    %v470 = vpop.f32.mrb[0].mxu0
    %v471 = vadd.f32 %v107, %v470
    %v472 = vpop.f32.mrb[0].mxu0
    %473 = vmatprep.mubr.f32.mxu0 0.0
    %474 = vmatmul.mubr.f32.gmra.mrb[0].mxu0 %v129
    %v475 = vpop.f32.mrb[0].mxu0
    %v476 = vadd.f32 %v112, %v475
    %v477 = vpop.f32.mrb[0].mxu0
    %478 = vmatprep.mubr.f32.mxu0 0.0
    %479 = vmatmul.mubr.f32.gmra.mrb[0].mxu0 %v132
    %v480 = vpop.f32.mrb[0].mxu0
    %v481 = vadd.f32 %v117, %v480
    %v482 = vpop.f32.mrb[0].mxu0
    %483 = vmatprep.mubr.f32.mxu0 0.0
    %484 = vmatmul.mubr.f32.gmra.mrb[0].mxu0 %v135
    %v485 = vpop.f32.mrb[0].mxu0
    %v486 = vadd.f32 %v122, %v485
    %v487 = vpop.f32.mrb[0].mxu0
    %488 = vdwg.mxu0
    %v489 = vmax.f32 %v471, 0.0
    %v490 = vmax.f32 %v476, 0.0
    %v491 = vmax.f32 %v481, 0.0
    %v492 = vmax.f32 %v486, 0.0
    %v493 = vld [vmem:[%s5] sm:$0x1]
    %v494 = vld [vmem:[#allocation2] sm:$0x1]
    %496 = vset.pattern.permute.xlu0 0
    %497 = vperm.xlu0 %496, %v494
    %v498 = vpop.permute.xlu0 %497
    %v500 = vlaneseq
    %v501 = vshrl.u32 %v500, 7
    %v502 = vsub.s32 0, %v501
    %v503 = vrot.slane %v498, %v502
    %v505 = vsel %vm124, %v493, 0
    %507 = vmatprep.subr.mxu0 0.0
    %508 = vmatpush1.msra.mxu0 %v489
    %509 = vmatprep.subr.mxu0 0.0
    %510 = vmatpush1.msra.mxu0 %v490
    %511 = vmatprep.subr.mxu0 0.0
    %512 = vmatpush1.msra.mxu0 %v491
    %513 = vmatprep.subr.mxu0 0.0
    %514 = vmatpush1.msra.mxu0 %v492
    %515 = vmatprep.subr.mxu0 0.0
    %516 = vmatpush1.msra.mxu0 0.0
    %517 = vmatprep.subr.mxu0 0.0
    %518 = vmatpush1.msra.mxu0 0.0
    %519 = vmatprep.subr.mxu0 0.0
    %520 = vmatpush1.msra.mxu0 0.0
    %521 = vmatprep.subr.mxu0 0.0
    %522 = vmatpush1.msra.mxu0 0.0
    %523 = vmatprep.subr.mxu0 0.0
    %524 = vmatpush1.msra.mxu0 0.0
    %525 = vmatprep.subr.mxu0 0.0
    %526 = vmatpush1.msra.mxu0 0.0
    %527 = vmatprep.subr.mxu0 0.0
    %528 = vmatpush1.msra.mxu0 0.0
    %529 = vmatprep.subr.mxu0 0.0
    %530 = vmatpush1.msra.mxu0 0.0
    %531 = vmatprep.subr.mxu0 0.0
    %532 = vmatpush1.msra.mxu0 0.0
    %533 = vmatprep.subr.mxu0 0.0
    %534 = vmatpush1.msra.mxu0 0.0
    %535 = vmatprep.subr.mxu0 0.0
    %536 = vmatpush1.msra.mxu0 0.0
    %537 = vmatprep.subr.mxu0 0.0
    %538 = vmatpush1.msra.mxu0 0.0
    %539 = vmatprep.subr.mxu0 0.0
    %540 = vmatpush1.msra.mxu0 0.0
    %541 = vmatprep.subr.mxu0 0.0
    %542 = vmatpush1.msra.mxu0 0.0
    %543 = vmatprep.subr.mxu0 0.0
    %544 = vmatpush1.msra.mxu0 0.0
    %545 = vmatprep.subr.mxu0 0.0
    %546 = vmatpush1.msra.mxu0 0.0
    %547 = vmatprep.subr.mxu0 0.0
    %548 = vmatpush1.msra.mxu0 0.0
    %549 = vmatprep.subr.mxu0 0.0
    %550 = vmatpush1.msra.mxu0 0.0
    %551 = vmatprep.subr.mxu0 0.0
    %552 = vmatpush1.msra.mxu0 0.0
    %553 = vmatprep.subr.mxu0 0.0
    %554 = vmatpush1.msra.mxu0 0.0
    %555 = vmatprep.subr.mxu0 0.0
    %556 = vmatpush1.msra.mxu0 0.0
    %557 = vmatprep.subr.mxu0 0.0
    %558 = vmatpush1.msra.mxu0 0.0
    %559 = vmatprep.subr.mxu0 0.0
    %560 = vmatpush1.msra.mxu0 0.0
    %561 = vmatprep.subr.mxu0 0.0
    %562 = vmatpush1.msra.mxu0 0.0
    %563 = vmatprep.subr.mxu0 0.0
    %564 = vmatpush1.msra.mxu0 0.0
    %565 = vmatprep.subr.mxu0 0.0
    %566 = vmatpush1.msra.mxu0 0.0
    %567 = vmatprep.subr.mxu0 0.0
    %568 = vmatpush1.msra.mxu0 0.0
    %569 = vmatprep.subr.mxu0 0.0
    %570 = vmatpush1.msra.mxu0 0.0
    %571 = vmatprep.mubr.f32.mxu0 0.0
    %572 = vmatmul.mubr.f32.gmra.mrb[0].mxu0 %v505
    %v573 = vpop.f32.mrb[0].mxu0
    %v574 = vadd.f32 %v503, %v573
    %v575 = vpop.f32.mrb[0].mxu0
    %576 = vdwg.mxu0
    %577 = vst [vmem:[#allocation3] sm:$0x1] %v574
    // Predicated region
    $region30: #{tpu_custom_call.1} parent=1 // pred_check
      _
    $region31: #{tpu_custom_call.1} parent=1 // pred_check_branch
      %579 = sbr.rel (0) target = $region33
    $region32: #{tpu_custom_call.1} parent=1 // pred_region
      %s581 = ssub.s32 16, 16
      %582 = vsyncadd [#allocation4], %s581
      %s584 = sshll.u32 [#allocation3], 4
      %s585 = int_to_ptr.vmem [resolvable:$true] %s584
      %587 = dma.vmem_to_hbm [thread:$0]  %s585, 16, %s7, [#allocation4]
    $region33: #{tpu_custom_call.1} parent=1 // pred_fallthru
      _
    // Predicated region
    $region34: #{tpu_custom_call.1} parent=1 // pred_check
      _
    $region35: #{tpu_custom_call.1} parent=1 // pred_check_branch
      %589 = sbr.rel (0) target = $region37
    $region36: #{tpu_custom_call.1} parent=1 // pred_region
      %590 = dma.done [#allocation4], 16
    $region37: #{tpu_custom_call.1} parent=1 // pred_fallthru
      _
    %591 = vsyncpa [#allocation4], 1

</llo_original>
